<compile_context>
chip_gen: v7x
topology: tpu7x:2x2x1
jax: 0.10.0
libtpu: 0.0.40
codegen_flags: <defaults>
</compile_context>

<pallas_src>
from functools import partial

import jax
import jax.numpy as jnp
from jax.experimental import pallas as pl
from jax.experimental.pallas import tpu as pltpu


DEFAULT_PROPERTY_WEIGHTS = {
    'qt': 1.0, 'Fr': 1.0, 'sigma_v0': 1.0, 'su': 1.0,
    'phi': 1.0, 'E': 1.0, 'permeability': 1.0,
}


# ----------------------------------------------------------------------------
# Fused Pallas kernel: one block holds the whole problem (M = batch*seq rows).
#   logits : [M, C]   f32   SBT classification logits
#   tgt    : [M, 1]   i32   SBT class labels
#   mask   : [M, 1]   f32   validity mask (1 = valid, 0 = padding)
#   pred   : [M, P]   f32   property predictions (P properties stacked on lanes)
#   ptgt   : [M, P]   f32   property targets
#   var    : [M, P]   f32   predicted variances (ignored if not enable_uncertainty)
#   w      : [1, P]   f32   per-property weights
# outputs:
#   total  : [1, 1]   sbt + sum of weighted property losses
#   sbt    : [1, 1]   masked label-smoothed cross-entropy
#   wprop  : [1, P]   weighted per-property losses
# ----------------------------------------------------------------------------
def _cpt_loss_kernel(logits_ref, tgt_ref, mask_ref, pred_ref, ptgt_ref, var_ref,
                     w_ref, total_ref, sbt_ref, prop_ref, *,
                     label_smoothing, n_classes, has_sbt, enable_uncertainty):
    mask_col = mask_ref[...]                                              # [M, 1]
    count = jnp.maximum(jnp.sum(mask_col, axis=0, keepdims=True), 1.0)    # [1, 1]
    inv_count = 1.0 / count

    # ---- label-smoothed cross-entropy (torch.nn.CrossEntropyLoss) ----------
    if has_sbt:
        x = logits_ref[...]                                               # [M, C]
        tgt = tgt_ref[...]                                                # [M, 1]
        row_max = jnp.max(x, axis=1, keepdims=True)
        lse = row_max + jnp.log(jnp.sum(jnp.exp(x - row_max), axis=1, keepdims=True))
        class_ids = jax.lax.broadcasted_iota(jnp.int32, x.shape, 1)
        onehot = jnp.where(class_ids == tgt, 1.0, 0.0)
        x_at_tgt = jnp.sum(x * onehot, axis=1, keepdims=True)             # logits[target]
        eps = label_smoothing
        # (1-eps)*(lse - x_t) + (eps/C)*sum_c (lse - x_c), simplified:
        ce = (lse
              - (1.0 - eps) * x_at_tgt
              - (eps / n_classes) * jnp.sum(x, axis=1, keepdims=True))    # [M, 1]
        sbt = jnp.sum(ce * mask_col, axis=0, keepdims=True) * inv_count   # [1, 1]
    else:
        sbt = jnp.zeros((1, 1), jnp.float32)

    # ---- per-property regression loss (Gaussian NLL or MSE) ----------------
    diff = pred_ref[...] - ptgt_ref[...]                                  # [M, P]
    if enable_uncertainty:
        var = jnp.maximum(var_ref[...], 1e-6)
        per_elem = 0.5 * (jnp.log(var) + diff * diff / var)
    else:
        per_elem = diff * diff
    psum = jnp.sum(per_elem * mask_col, axis=0, keepdims=True)            # [1, P]
    wprop = psum * w_ref[...] * inv_count                                 # [1, P]

    total_ref[...] = sbt + jnp.sum(wprop, axis=1, keepdims=True)
    sbt_ref[...] = sbt
    prop_ref[...] = wprop


# ----------------------------------------------------------------------------
# Python wrapper mirroring CPTLoss.forward
# ----------------------------------------------------------------------------
def cpt_loss(predictions, targets, mask=None, *, n_soil_classes=9,
             enable_uncertainty=True, label_smoothing=0.1, property_weights=None):
    if property_weights is None:
        property_weights = DEFAULT_PROPERTY_WEIGHTS

    logits = predictions['sbt_logits']
    B, S = logits.shape[0], logits.shape[1]
    C = n_soil_classes
    M = B * S

    if mask is None:
        mask = jnp.ones((B, S), jnp.bool_)
    mask_col = mask.astype(jnp.float32).reshape(M, 1)

    has_sbt = 'sbt_target' in targets
    if has_sbt:
        tgt_col = targets['sbt_target'].reshape(M, 1).astype(jnp.int32)
    else:
        tgt_col = jnp.zeros((M, 1), jnp.int32)
    logits2d = logits.reshape(M, C).astype(jnp.float32)

    # Properties present in both dicts (and with an uncertainty head if enabled),
    # mirroring the PyTorch control flow (static, key-level dispatch).
    names = []
    for name in property_weights:
        if name in targets and name in predictions:
            if enable_uncertainty and predictions.get(f'{name}_uncertainty') is None:
                continue
            names.append(name)
    P = len(names)

    if P > 0:
        pred_mat = jnp.concatenate(
            [predictions[n].reshape(M, 1).astype(jnp.float32) for n in names], axis=1)
        ptgt_mat = jnp.concatenate(
            [targets[n].reshape(M, 1).astype(jnp.float32) for n in names], axis=1)
        if enable_uncertainty:
            var_mat = jnp.concatenate(
                [predictions[f'{n}_uncertainty'].reshape(M, 1).astype(jnp.float32)
                 for n in names], axis=1)
        else:
            var_mat = jnp.ones((M, P), jnp.float32)
        w_row = jnp.asarray([[float(property_weights[n]) for n in names]], jnp.float32)
        Pk = P
    else:
        # dummy zero-weight column keeps the kernel shapes static; contributes 0
        pred_mat = jnp.zeros((M, 1), jnp.float32)
        ptgt_mat = jnp.zeros((M, 1), jnp.float32)
        var_mat = jnp.ones((M, 1), jnp.float32)
        w_row = jnp.zeros((1, 1), jnp.float32)
        Pk = 1

    kernel = partial(_cpt_loss_kernel,
                     label_smoothing=float(label_smoothing),
                     n_classes=float(n_soil_classes),
                     has_sbt=has_sbt,
                     enable_uncertainty=bool(enable_uncertainty))

    total, sbt, wprop = pl.pallas_call(
        kernel,
        grid=(1,),
        in_specs=[
            pl.BlockSpec((M, C), lambda i: (0, 0)),
            pl.BlockSpec((M, 1), lambda i: (0, 0)),
            pl.BlockSpec((M, 1), lambda i: (0, 0)),
            pl.BlockSpec((M, Pk), lambda i: (0, 0)),
            pl.BlockSpec((M, Pk), lambda i: (0, 0)),
            pl.BlockSpec((M, Pk), lambda i: (0, 0)),
            pl.BlockSpec((1, Pk), lambda i: (0, 0)),
        ],
        out_specs=(
            pl.BlockSpec((1, 1), lambda i: (0, 0)),
            pl.BlockSpec((1, 1), lambda i: (0, 0)),
            pl.BlockSpec((1, Pk), lambda i: (0, 0)),
        ),
        out_shape=(
            jax.ShapeDtypeStruct((1, 1), jnp.float32),
            jax.ShapeDtypeStruct((1, 1), jnp.float32),
            jax.ShapeDtypeStruct((1, Pk), jnp.float32),
        ),
        compiler_params=pltpu.CompilerParams(dimension_semantics=("arbitrary",)),
    )(logits2d, tgt_col, mask_col, pred_mat, ptgt_mat, var_mat, w_row)

    losses = {'total': total[0, 0], 'sbt': sbt[0, 0]}
    for idx, name in enumerate(names):
        losses[name] = wprop[0, idx]
    return losses


class CPTLoss:
    """Thin object wrapper mirroring the nn.Module interface."""

    def __init__(self, n_soil_classes=9, enable_uncertainty=True,
                 label_smoothing=0.1, property_weights=None):
        self.n_soil_classes = n_soil_classes
        self.enable_uncertainty = enable_uncertainty
        self.label_smoothing = label_smoothing
        self.property_weights = property_weights

    def __call__(self, predictions, targets, mask=None):
        return cpt_loss(predictions, targets, mask,
                        n_soil_classes=self.n_soil_classes,
                        enable_uncertainty=self.enable_uncertainty,
                        label_smoothing=self.label_smoothing,
                        property_weights=self.property_weights)


# ----------------------------------------------------------------------------
# Pure-JAX reference (for correctness assertion only)
# ----------------------------------------------------------------------------
def cpt_loss_ref(predictions, targets, mask, *, n_soil_classes=9,
                 enable_uncertainty=True, label_smoothing=0.1,
                 property_weights=None):
    if property_weights is None:
        property_weights = DEFAULT_PROPERTY_WEIGHTS
    logits = predictions['sbt_logits']
    B, S = logits.shape[:2]
    if mask is None:
        mask = jnp.ones((B, S), jnp.bool_)
    mask_f = mask.astype(jnp.float32)
    count = jnp.maximum(mask_f.sum(), 1.0)

    sbt = jnp.float32(0.0)
    if 'sbt_target' in targets:
        logp = jax.nn.log_softmax(logits, axis=-1)
        tgt = targets['sbt_target'].astype(jnp.int32)
        nll = -jnp.take_along_axis(logp, tgt[..., None], axis=-1)[..., 0]
        smooth = -logp.mean(axis=-1)
        eps = label_smoothing
        ce = (1.0 - eps) * nll + eps * smooth
        sbt = (ce * mask_f).sum() / count

    total = sbt
    out = {'sbt': sbt}
    for name, w in property_weights.items():
        if name in targets and name in predictions:
            pred, tgtv = predictions[name], targets[name]
            if enable_uncertainty:
                unc = predictions.get(f'{name}_uncertainty')
                if unc is None:
                    continue
                var = jnp.maximum(unc, 1e-6)
                loss = 0.5 * (jnp.log(var) + (pred - tgtv) ** 2 / var)
            else:
                loss = (pred - tgtv) ** 2
            wl = ((loss * mask_f[..., None]).sum() / count) * w
            out[name] = wl
            total = total + wl
    out['total'] = total
    return out


# ----------------------------------------------------------------------------
if __name__ == "__main__":
    B, S, C = 2, 16, 9

    key = jax.random.PRNGKey(0)
    keys = iter(jax.random.split(key, 32))

    predictions = {'sbt_logits': jax.random.normal(next(keys), (B, S, C), jnp.float32)}
    targets = {'sbt_target': jax.random.randint(next(keys), (B, S), 0, C, jnp.int32)}
    for name in DEFAULT_PROPERTY_WEIGHTS:
        predictions[name] = jax.random.normal(next(keys), (B, S, 1), jnp.float32)
        predictions[f'{name}_uncertainty'] = (
            0.1 + 0.9 * jax.random.uniform(next(keys), (B, S, 1), jnp.float32))
        targets[name] = jax.random.normal(next(keys), (B, S, 1), jnp.float32)

    # deterministic padding mask: sample 0 fully valid, sample 1 padded after t=11
    pos = jnp.arange(S)[None, :]
    mask = pos < jnp.array([[S], [12]])

    loss_fn = jax.jit(lambda p, t, m: cpt_loss(p, t, m))
    losses = jax.block_until_ready(loss_fn(predictions, targets, mask))

    ref = cpt_loss_ref(predictions, targets, mask)
    for k, v in ref.items():
        assert k in losses, f"missing loss key {k}"
        assert bool(jnp.isfinite(losses[k])), f"non-finite loss {k}"
        assert bool(jnp.allclose(losses[k], v, rtol=1e-5, atol=1e-5)), (
            k, float(losses[k]), float(v))

    print("KERNEL_OK")
</pallas_src>

<mosaic_0001>
module attributes {stable_mosaic.version = 11 : i64} {
  func.func @_cpt_loss_kernel(%arg0: i32, %arg1: memref<32x9xf32, #tpu.memory_space<vmem>>, %arg2: memref<32x1xi32, #tpu.memory_space<vmem>>, %arg3: memref<32x1xf32, #tpu.memory_space<vmem>>, %arg4: memref<32x7xf32, #tpu.memory_space<vmem>>, %arg5: memref<32x7xf32, #tpu.memory_space<vmem>>, %arg6: memref<32x7xf32, #tpu.memory_space<vmem>>, %arg7: memref<1x7xf32, #tpu.memory_space<vmem>>, %arg8: memref<1x1xf32, #tpu.memory_space<vmem>>, %arg9: memref<1x1xf32, #tpu.memory_space<vmem>>, %arg10: memref<1x7xf32, #tpu.memory_space<vmem>>) attributes {dimension_semantics = [#tpu.dimension_semantics<arbitrary>], iteration_bounds = array<i64: 1>, scalar_prefetch = 0 : i64, scratch_operands = 0 : i64, tpu.core_type = #tpu.core_type<tc>, window_params = [{pipeline_mode = #tpu.pipeline_mode<synchronous>, transform_indices = @transform_0, window_bounds = array<i64: 32, 9>}, {pipeline_mode = #tpu.pipeline_mode<synchronous>, transform_indices = @transform_1, window_bounds = array<i64: 32, 1>}, {pipeline_mode = #tpu.pipeline_mode<synchronous>, transform_indices = @transform_2, window_bounds = array<i64: 32, 1>}, {pipeline_mode = #tpu.pipeline_mode<synchronous>, transform_indices = @transform_3, window_bounds = array<i64: 32, 7>}, {pipeline_mode = #tpu.pipeline_mode<synchronous>, transform_indices = @transform_4, window_bounds = array<i64: 32, 7>}, {pipeline_mode = #tpu.pipeline_mode<synchronous>, transform_indices = @transform_5, window_bounds = array<i64: 32, 7>}, {pipeline_mode = #tpu.pipeline_mode<synchronous>, transform_indices = @transform_6, window_bounds = array<i64: 1, 7>}, {pipeline_mode = #tpu.pipeline_mode<synchronous>, transform_indices = @transform_7, window_bounds = array<i64: 1, 1>}, {pipeline_mode = #tpu.pipeline_mode<synchronous>, transform_indices = @transform_8, window_bounds = array<i64: 1, 1>}, {pipeline_mode = #tpu.pipeline_mode<synchronous>, transform_indices = @transform_9, window_bounds = array<i64: 1, 7>}]} {
    %c0 = arith.constant 0 : index
    %c0_0 = arith.constant 0 : index
    %0 = vector.load %arg3[%c0, %c0_0] : memref<32x1xf32, #tpu.memory_space<vmem>>, vector<32x1xf32>
    %cst = arith.constant dense<0.000000e+00> : vector<1xf32>
    %1 = vector.multi_reduction <add>, %0, %cst [0] : vector<32x1xf32> to vector<1xf32>
    %2 = vector.shape_cast %1 : vector<1xf32> to vector<1x1xf32>
    %cst_1 = arith.constant 1.000000e+00 : f32
    %3 = vector.broadcast %cst_1 : f32 to vector<1x1xf32>
    %4 = arith.maximumf %2, %3 : vector<1x1xf32>
    %cst_2 = arith.constant 1.000000e+00 : f32
    %5 = vector.broadcast %cst_2 : f32 to vector<1x1xf32>
    %6 = arith.divf %5, %4 : vector<1x1xf32>
    %c0_3 = arith.constant 0 : index
    %c0_4 = arith.constant 0 : index
    %7 = vector.load %arg1[%c0_3, %c0_4] : memref<32x9xf32, #tpu.memory_space<vmem>>, vector<32x9xf32>
    %c0_5 = arith.constant 0 : index
    %c0_6 = arith.constant 0 : index
    %8 = vector.load %arg2[%c0_5, %c0_6] : memref<32x1xi32, #tpu.memory_space<vmem>>, vector<32x1xi32>
    %cst_7 = arith.constant dense<0xFF800000> : vector<32xf32>
    %9 = vector.multi_reduction <maximumf>, %7, %cst_7 [1] : vector<32x9xf32> to vector<32xf32>
    %10 = vector.shape_cast %9 : vector<32xf32> to vector<32x1xf32>
    %11 = vector.broadcast %10 : vector<32x1xf32> to vector<32x9xf32>
    %12 = arith.subf %7, %11 : vector<32x9xf32>
    %13 = math.exp %12 : vector<32x9xf32>
    %cst_8 = arith.constant dense<0.000000e+00> : vector<32xf32>
    %14 = vector.multi_reduction <add>, %13, %cst_8 [1] : vector<32x9xf32> to vector<32xf32>
    %15 = vector.shape_cast %14 : vector<32xf32> to vector<32x1xf32>
    %16 = math.log %15 : vector<32x1xf32>
    %17 = arith.addf %10, %16 : vector<32x1xf32>
    %18 = tpu.iota {dimensions = array<i32: 1>} : vector<32x9xi32>
    %19 = vector.broadcast %8 : vector<32x1xi32> to vector<32x9xi32>
    %20 = arith.cmpi eq, %18, %19 : vector<32x9xi32>
    %cst_9 = arith.constant 1.000000e+00 : f32
    %cst_10 = arith.constant 0.000000e+00 : f32
    %21 = vector.broadcast %cst_9 : f32 to vector<32x9xf32>
    %22 = vector.broadcast %cst_10 : f32 to vector<32x9xf32>
    %23 = arith.select %20, %21, %22 : vector<32x9xi1>, vector<32x9xf32>
    %24 = arith.mulf %7, %23 : vector<32x9xf32>
    %cst_11 = arith.constant dense<0.000000e+00> : vector<32xf32>
    %25 = vector.multi_reduction <add>, %24, %cst_11 [1] : vector<32x9xf32> to vector<32xf32>
    %26 = vector.shape_cast %25 : vector<32xf32> to vector<32x1xf32>
    %cst_12 = arith.constant 0.899999976 : f32
    %27 = vector.broadcast %cst_12 : f32 to vector<32x1xf32>
    %28 = arith.mulf %27, %26 : vector<32x1xf32>
    %29 = arith.subf %17, %28 : vector<32x1xf32>
    %cst_13 = arith.constant dense<0.000000e+00> : vector<32xf32>
    %30 = vector.multi_reduction <add>, %7, %cst_13 [1] : vector<32x9xf32> to vector<32xf32>
    %31 = vector.shape_cast %30 : vector<32xf32> to vector<32x1xf32>
    %cst_14 = arith.constant 0.0111111114 : f32
    %32 = vector.broadcast %cst_14 : f32 to vector<32x1xf32>
    %33 = arith.mulf %32, %31 : vector<32x1xf32>
    %34 = arith.subf %29, %33 : vector<32x1xf32>
    %35 = arith.mulf %34, %0 : vector<32x1xf32>
    %cst_15 = arith.constant dense<0.000000e+00> : vector<1xf32>
    %36 = vector.multi_reduction <add>, %35, %cst_15 [0] : vector<32x1xf32> to vector<1xf32>
    %37 = vector.shape_cast %36 : vector<1xf32> to vector<1x1xf32>
    %38 = arith.mulf %37, %6 : vector<1x1xf32>
    %c0_16 = arith.constant 0 : index
    %c0_17 = arith.constant 0 : index
    %39 = vector.load %arg4[%c0_16, %c0_17] : memref<32x7xf32, #tpu.memory_space<vmem>>, vector<32x7xf32>
    %c0_18 = arith.constant 0 : index
    %c0_19 = arith.constant 0 : index
    %40 = vector.load %arg5[%c0_18, %c0_19] : memref<32x7xf32, #tpu.memory_space<vmem>>, vector<32x7xf32>
    %41 = arith.subf %39, %40 : vector<32x7xf32>
    %c0_20 = arith.constant 0 : index
    %c0_21 = arith.constant 0 : index
    %42 = vector.load %arg6[%c0_20, %c0_21] : memref<32x7xf32, #tpu.memory_space<vmem>>, vector<32x7xf32>
    %cst_22 = arith.constant 9.99999997E-7 : f32
    %43 = vector.broadcast %cst_22 : f32 to vector<32x7xf32>
    %44 = arith.maximumf %42, %43 : vector<32x7xf32>
    %45 = math.log %44 : vector<32x7xf32>
    %46 = arith.mulf %41, %41 : vector<32x7xf32>
    %47 = arith.divf %46, %44 : vector<32x7xf32>
    %48 = arith.addf %45, %47 : vector<32x7xf32>
    %cst_23 = arith.constant 5.000000e-01 : f32
    %49 = vector.broadcast %cst_23 : f32 to vector<32x7xf32>
    %50 = arith.mulf %49, %48 : vector<32x7xf32>
    %51 = vector.broadcast %0 : vector<32x1xf32> to vector<32x7xf32>
    %52 = arith.mulf %50, %51 : vector<32x7xf32>
    %cst_24 = arith.constant dense<0.000000e+00> : vector<7xf32>
    %53 = vector.multi_reduction <add>, %52, %cst_24 [0] : vector<32x7xf32> to vector<7xf32>
    %54 = vector.shape_cast %53 : vector<7xf32> to vector<1x7xf32>
    %c0_25 = arith.constant 0 : index
    %c0_26 = arith.constant 0 : index
    %55 = vector.load %arg7[%c0_25, %c0_26] : memref<1x7xf32, #tpu.memory_space<vmem>>, vector<1x7xf32>
    %56 = arith.mulf %54, %55 : vector<1x7xf32>
    %57 = vector.broadcast %6 : vector<1x1xf32> to vector<1x7xf32>
    %58 = arith.mulf %56, %57 : vector<1x7xf32>
    %cst_27 = arith.constant dense<0.000000e+00> : vector<1xf32>
    %59 = vector.multi_reduction <add>, %58, %cst_27 [1] : vector<1x7xf32> to vector<1xf32>
    %60 = vector.shape_cast %59 : vector<1xf32> to vector<1x1xf32>
    %61 = arith.addf %38, %60 : vector<1x1xf32>
    %c0_28 = arith.constant 0 : index
    %c0_29 = arith.constant 0 : index
    %62 = vector.load %arg8[%c0_28, %c0_29] : memref<1x1xf32, #tpu.memory_space<vmem>>, vector<1x1xf32>
    tpu.vector_store %arg8[%c0_28, %c0_29], %61 {strides = array<i32>} : memref<1x1xf32, #tpu.memory_space<vmem>>, vector<1x1xf32>,
    %c0_30 = arith.constant 0 : index
    %c0_31 = arith.constant 0 : index
    %63 = vector.load %arg9[%c0_30, %c0_31] : memref<1x1xf32, #tpu.memory_space<vmem>>, vector<1x1xf32>
    tpu.vector_store %arg9[%c0_30, %c0_31], %38 {strides = array<i32>} : memref<1x1xf32, #tpu.memory_space<vmem>>, vector<1x1xf32>,
    %c0_32 = arith.constant 0 : index
    %c0_33 = arith.constant 0 : index
    %64 = vector.load %arg10[%c0_32, %c0_33] : memref<1x7xf32, #tpu.memory_space<vmem>>, vector<1x7xf32>
    tpu.vector_store %arg10[%c0_32, %c0_33], %58 {strides = array<i32>} : memref<1x7xf32, #tpu.memory_space<vmem>>, vector<1x7xf32>,
    return
  }
  func.func @transform_0(%arg0: i32) -> (i32, i32) {
    %c0_i32 = arith.constant 0 : i32
    %c0_i32_0 = arith.constant 0 : i32
    %c0_i32_1 = arith.constant 0 : i32
    return %c0_i32, %c0_i32_0 : i32, i32
  }
  func.func @transform_1(%arg0: i32) -> (i32, i32) {
    %c0_i32 = arith.constant 0 : i32
    %c0_i32_0 = arith.constant 0 : i32
    %c0_i32_1 = arith.constant 0 : i32
    return %c0_i32, %c0_i32_0 : i32, i32
  }
  func.func @transform_2(%arg0: i32) -> (i32, i32) {
    %c0_i32 = arith.constant 0 : i32
    %c0_i32_0 = arith.constant 0 : i32
    %c0_i32_1 = arith.constant 0 : i32
    return %c0_i32, %c0_i32_0 : i32, i32
  }
  func.func @transform_3(%arg0: i32) -> (i32, i32) {
    %c0_i32 = arith.constant 0 : i32
    %c0_i32_0 = arith.constant 0 : i32
    %c0_i32_1 = arith.constant 0 : i32
    return %c0_i32, %c0_i32_0 : i32, i32
  }
  func.func @transform_4(%arg0: i32) -> (i32, i32) {
    %c0_i32 = arith.constant 0 : i32
    %c0_i32_0 = arith.constant 0 : i32
    %c0_i32_1 = arith.constant 0 : i32
    return %c0_i32, %c0_i32_0 : i32, i32
  }
  func.func @transform_5(%arg0: i32) -> (i32, i32) {
    %c0_i32 = arith.constant 0 : i32
    %c0_i32_0 = arith.constant 0 : i32
    %c0_i32_1 = arith.constant 0 : i32
    return %c0_i32, %c0_i32_0 : i32, i32
  }
  func.func @transform_6(%arg0: i32) -> (i32, i32) {
    %c0_i32 = arith.constant 0 : i32
    %c0_i32_0 = arith.constant 0 : i32
    %c0_i32_1 = arith.constant 0 : i32
    return %c0_i32, %c0_i32_0 : i32, i32
  }
  func.func @transform_7(%arg0: i32) -> (i32, i32) {
    %c0_i32 = arith.constant 0 : i32
    %c0_i32_0 = arith.constant 0 : i32
    %c0_i32_1 = arith.constant 0 : i32
    return %c0_i32, %c0_i32_0 : i32, i32
  }
  func.func @transform_8(%arg0: i32) -> (i32, i32) {
    %c0_i32 = arith.constant 0 : i32
    %c0_i32_0 = arith.constant 0 : i32
    %c0_i32_1 = arith.constant 0 : i32
    return %c0_i32, %c0_i32_0 : i32, i32
  }
  func.func @transform_9(%arg0: i32) -> (i32, i32) {
    %c0_i32 = arith.constant 0 : i32
    %c0_i32_0 = arith.constant 0 : i32
    %c0_i32_1 = arith.constant 0 : i32
    return %c0_i32, %c0_i32_0 : i32, i32
  }
}

</mosaic_0001>

<llo_original>
// kernel: _lambda_.1
$region0: #{_lambda_.1}
  #allocation0 [shape = 'u32[]', space=smem, size = 0x4, offset = 0x4, fixed_abs, tag = 'smem constant byte address 0x4 - core index']
  #allocation1 [shape = 'u32[144,128]{1,0:T(1,128)}', space=vmem, size = 0x12000, scoped, tag = 'internal scratch']
  %s0 = inlined_call_operand.vmem [shape: f32[32,9], index: 0, kind: input, shape index: {}]
  %s1 = inlined_call_operand.vmem [shape: s32[32,1], index: 1, kind: input, shape index: {}]
  %s2 = inlined_call_operand.vmem [shape: f32[32,1], index: 2, kind: input, shape index: {}]
  %s3 = inlined_call_operand.vmem [shape: f32[32,7], index: 3, kind: input, shape index: {}]
  %s4 = inlined_call_operand.vmem [shape: f32[32,7], index: 4, kind: input, shape index: {}]
  %s5 = inlined_call_operand.vmem [shape: f32[32,7], index: 5, kind: input, shape index: {}]
  %s6 = inlined_call_operand.vmem [shape: f32[1,7], index: 6, kind: input, shape index: {}]
  %s7 = inlined_call_operand.hbm [shape: f32[1,1], index: 7, kind: output, shape index: {0}]
  %s8 = inlined_call_operand.hbm [shape: f32[1,1], index: 8, kind: output, shape index: {1}]
  %s9 = inlined_call_operand.vmem [shape: f32[1,7], index: 9, kind: output, shape index: {2}]
  %10 = xla_tuple %s7, %s8, %s9
  %s11 = sld [smem:[#allocation0]]
  $region54: #{_lambda_.1} parent=0
    _
  %s13 = ssub.s32 1, %s11
  %s14 = scalar_select 0, %s13, %s11
  $region1: #{_lambda_.1} parent=0
    #allocation2 [shape = 'u8[512]{0}', space=vmem, size = 0x400, scoped, tag = 'output window, operand 0, single buffered']
    #allocation3 [shape = 's32[1]{0}', space=sflag, size = 0x4, scoped, tag = 'scoped memory for _lambda_.1']
    #allocation4 [shape = 'u8[512]{0}', space=vmem, size = 0x400, scoped, tag = 'output window, operand 1, single buffered']
    #allocation5 [shape = 's32[1]{0}', space=sflag, size = 0x4, scoped, tag = 'scoped memory for _lambda_.1']
    %15 = vsyncpa [#allocation3], 0
    %16 = vsyncpa [#allocation5], 0
    // Predicated region
    $region2: #{_lambda_.1} parent=1 // pred_check
      _
    $region3: #{_lambda_.1} parent=1 // pred_check_branch
      %18 = sbr.rel (0) target = $region5
    $region4: #{_lambda_.1} parent=1 // pred_region
      _
    $region5: #{_lambda_.1} parent=1 // pred_fallthru
      _
    // Predicated region
    $region6: #{_lambda_.1} parent=1 // pred_check
      _
    $region7: #{_lambda_.1} parent=1 // pred_check_branch
      %20 = sbr.rel (0) target = $region9
    $region8: #{_lambda_.1} parent=1 // pred_region
      _
    $region9: #{_lambda_.1} parent=1 // pred_fallthru
      _
    // Predicated region
    $region10: #{_lambda_.1} parent=1 // pred_check
      _
    $region11: #{_lambda_.1} parent=1 // pred_check_branch
      %22 = sbr.rel (0) target = $region13
    $region12: #{_lambda_.1} parent=1 // pred_region
      _
    $region13: #{_lambda_.1} parent=1 // pred_fallthru
      _
    // Predicated region
    $region14: #{_lambda_.1} parent=1 // pred_check
      _
    $region15: #{_lambda_.1} parent=1 // pred_check_branch
      %24 = sbr.rel (0) target = $region17
    $region16: #{_lambda_.1} parent=1 // pred_region
      _
    $region17: #{_lambda_.1} parent=1 // pred_fallthru
      _
    // Predicated region
    $region18: #{_lambda_.1} parent=1 // pred_check
      _
    $region19: #{_lambda_.1} parent=1 // pred_check_branch
      %26 = sbr.rel (0) target = $region21
    $region20: #{_lambda_.1} parent=1 // pred_region
      _
    $region21: #{_lambda_.1} parent=1 // pred_fallthru
      _
    // Predicated region
    $region22: #{_lambda_.1} parent=1 // pred_check
      _
    $region23: #{_lambda_.1} parent=1 // pred_check_branch
      %28 = sbr.rel (0) target = $region25
    $region24: #{_lambda_.1} parent=1 // pred_region
      _
    $region25: #{_lambda_.1} parent=1 // pred_fallthru
      _
    // Predicated region
    $region26: #{_lambda_.1} parent=1 // pred_check
      _
    $region27: #{_lambda_.1} parent=1 // pred_check_branch
      %30 = sbr.rel (0) target = $region29
    $region28: #{_lambda_.1} parent=1 // pred_region
      _
    $region29: #{_lambda_.1} parent=1 // pred_fallthru
      _
    %v31 = vld [vmem:[%s2] sm:$0xff]
    %v32 = vld [vmem:[%s2 + $0x8] sm:$0xff]
    %v33 = vld [vmem:[%s2 + $0x10] sm:$0xff]
    %v34 = vld [vmem:[%s2 + $0x18] sm:$0xff]
    %vm35 = vcmask 7168
    %v36 = vsel %vm35, %v31, 0.0
    %v37 = vsel %vm35, %v32, 0.0
    %v38 = vadd.f32 %v36, %v37
    %v39 = vsel %vm35, %v33, 0.0
    %v40 = vadd.f32 %v38, %v39
    %v41 = vsel %vm35, %v34, 0.0
    %v42 = vadd.f32 %v40, %v41
    %v43 = vrot.slane %v42, 4
    %v44 = vadd.f32 %v42, %v43
    %v45 = vrot.slane %v44, 2
    %v46 = vadd.f32 %v44, %v45
    %v47 = vrot.slane %v46, 1
    %v48 = vadd.f32 %v46, %v47
    %v49 = vmax.f32 %v48, 1.0
    %v50 = vrcp.pop %v49
    %v51 = vmul.f32 1.0, %v50
    %v52 = vld [vmem:[%s0] sm:$0xff]
    %v53 = vld [vmem:[%s0 + $0x8] sm:$0xff]
    %v54 = vld [vmem:[%s0 + $0x10] sm:$0xff]
    %v55 = vld [vmem:[%s0 + $0x18] sm:$0xff]
    %v56 = vld [vmem:[%s1] sm:$0xff]
    %v57 = vld [vmem:[%s1 + $0x8] sm:$0xff]
    %v58 = vld [vmem:[%s1 + $0x10] sm:$0xff]
    %v59 = vld [vmem:[%s1 + $0x18] sm:$0xff]
    %vm60 = vcmask 72704
    %v61 = vsel %vm60, %v52, -inf
    %62 = vmax.xlane.f32.xlu0 %v61
    %v63 = vpop.xlane.xlu0 %62
    %v64 = vsel %vm60, %v53, -inf
    %65 = vmax.xlane.f32.xlu0 %v64
    %v66 = vpop.xlane.xlu0 %65
    %v67 = vsel %vm60, %v54, -inf
    %68 = vmax.xlane.f32.xlu0 %v67
    %v69 = vpop.xlane.xlu0 %68
    %v70 = vsel %vm60, %v55, -inf
    %71 = vmax.xlane.f32.xlu0 %v70
    %v72 = vpop.xlane.xlu0 %71
    %v73 = vsub.f32 %v52, %v63
    %v74 = vsub.f32 %v53, %v66
    %v75 = vsub.f32 %v54, %v69
    %v76 = vsub.f32 %v55, %v72
    %v77 = vmul.f32 %v73, 1.442695
    %v78 = vpow.pop %v77
    %v79 = vmul.f32 %v74, 1.442695
    %v80 = vpow.pop %v79
    %v81 = vmul.f32 %v75, 1.442695
    %v82 = vpow.pop %v81
    %v83 = vmul.f32 %v76, 1.442695
    %v84 = vpow.pop %v83
    %v85 = vsel %vm60, %v78, 0.0
    %86 = vadd.xlane.f32.xlu0 %v85
    %v87 = vpop.xlane.xlu0 %86
    %v88 = vsel %vm60, %v80, 0.0
    %89 = vadd.xlane.f32.xlu0 %v88
    %v90 = vpop.xlane.xlu0 %89
    %v91 = vsel %vm60, %v82, 0.0
    %92 = vadd.xlane.f32.xlu0 %v91
    %v93 = vpop.xlane.xlu0 %92
    %v94 = vsel %vm60, %v84, 0.0
    %95 = vadd.xlane.f32.xlu0 %v94
    %v96 = vpop.xlane.xlu0 %95
    %v97 = vlog2.pop %v87
    %v98 = vmul.f32 %v97, 0.6931472
    %v99 = vlog2.pop %v90
    %v100 = vmul.f32 %v99, 0.6931472
    %v101 = vlog2.pop %v93
    %v102 = vmul.f32 %v101, 0.6931472
    %v103 = vlog2.pop %v96
    %v104 = vmul.f32 %v103, 0.6931472
    %v105 = vadd.f32 %v63, %v98
    %v106 = vadd.f32 %v66, %v100
    %v107 = vadd.f32 %v69, %v102
    %v108 = vadd.f32 %v72, %v104
    %v109 = vlaneseq
    %v110 = vand.u32 %v109, 127
    %111 = vset.pattern.permute.xlu0 0
    %112 = vperm.xlu0 %111, %v56
    %v113 = vpop.permute.xlu0 %112
    %114 = vset.pattern.permute.xlu0 0
    %115 = vperm.xlu0 %114, %v57
    %v116 = vpop.permute.xlu0 %115
    %117 = vset.pattern.permute.xlu0 0
    %118 = vperm.xlu0 %117, %v58
    %v119 = vpop.permute.xlu0 %118
    %120 = vset.pattern.permute.xlu0 0
    %121 = vperm.xlu0 %120, %v59
    %v122 = vpop.permute.xlu0 %121
    %vm123 = vcmp.eq.s32.totalorder %v110, %v113
    %vm124 = vcmp.eq.s32.totalorder %v110, %v116
    %vm125 = vcmp.eq.s32.totalorder %v110, %v119
    %vm126 = vcmp.eq.s32.totalorder %v110, %v122
    %v127 = vsel %vm123, 1.0, 0.0
    %v128 = vsel %vm124, 1.0, 0.0
    %v129 = vsel %vm125, 1.0, 0.0
    %v130 = vsel %vm126, 1.0, 0.0
    %v131 = vmul.f32 %v52, %v127
    %v132 = vmul.f32 %v53, %v128
    %v133 = vmul.f32 %v54, %v129
    %v134 = vmul.f32 %v55, %v130
    %v135 = vsel %vm60, %v131, 0.0
    %136 = vadd.xlane.f32.xlu0 %v135
    %v137 = vpop.xlane.xlu0 %136
    %v138 = vsel %vm60, %v132, 0.0
    %139 = vadd.xlane.f32.xlu0 %v138
    %v140 = vpop.xlane.xlu0 %139
    %v141 = vsel %vm60, %v133, 0.0
    %142 = vadd.xlane.f32.xlu0 %v141
    %v143 = vpop.xlane.xlu0 %142
    %v144 = vsel %vm60, %v134, 0.0
    %145 = vadd.xlane.f32.xlu0 %v144
    %v146 = vpop.xlane.xlu0 %145
    %v147 = vmul.f32 %v137, 0.9
    %v148 = vmul.f32 %v140, 0.9
    %v149 = vmul.f32 %v143, 0.9
    %v150 = vmul.f32 %v146, 0.9
    %v151 = vsub.f32 %v105, %v147
    %v152 = vsub.f32 %v106, %v148
    %v153 = vsub.f32 %v107, %v149
    %v154 = vsub.f32 %v108, %v150
    %v155 = vsel %vm60, %v52, 0.0
    %156 = vadd.xlane.f32.xlu0 %v155
    %v157 = vpop.xlane.xlu0 %156
    %v158 = vsel %vm60, %v53, 0.0
    %159 = vadd.xlane.f32.xlu0 %v158
    %v160 = vpop.xlane.xlu0 %159
    %v161 = vsel %vm60, %v54, 0.0
    %162 = vadd.xlane.f32.xlu0 %v161
    %v163 = vpop.xlane.xlu0 %162
    %v164 = vsel %vm60, %v55, 0.0
    %165 = vadd.xlane.f32.xlu0 %v164
    %v166 = vpop.xlane.xlu0 %165
    %v167 = vmul.f32 %v157, 0.011111111
    %v168 = vmul.f32 %v160, 0.011111111
    %v169 = vmul.f32 %v163, 0.011111111
    %v170 = vmul.f32 %v166, 0.011111111
    %v171 = vsub.f32 %v151, %v167
    %v172 = vsub.f32 %v152, %v168
    %v173 = vsub.f32 %v153, %v169
    %v174 = vsub.f32 %v154, %v170
    %v175 = vmul.f32 %v171, %v31
    %v176 = vmul.f32 %v172, %v32
    %v177 = vmul.f32 %v173, %v33
    %v178 = vmul.f32 %v174, %v34
    %v179 = vsel %vm35, %v175, 0.0
    %v180 = vsel %vm35, %v176, 0.0
    %v181 = vadd.f32 %v179, %v180
    %v182 = vsel %vm35, %v177, 0.0
    %v183 = vadd.f32 %v181, %v182
    %v184 = vsel %vm35, %v178, 0.0
    %v185 = vadd.f32 %v183, %v184
    %v186 = vrot.slane %v185, 4
    %v187 = vadd.f32 %v185, %v186
    %v188 = vrot.slane %v187, 2
    %v189 = vadd.f32 %v187, %v188
    %v190 = vrot.slane %v189, 1
    %v191 = vadd.f32 %v189, %v190
    %v192 = vmul.f32 %v191, %v51
    %v193 = vld [vmem:[%s3] sm:$0xff]
    %v194 = vld [vmem:[%s3 + $0x8] sm:$0xff]
    %v195 = vld [vmem:[%s3 + $0x10] sm:$0xff]
    %v196 = vld [vmem:[%s3 + $0x18] sm:$0xff]
    %v197 = vld [vmem:[%s4] sm:$0xff]
    %v198 = vld [vmem:[%s4 + $0x8] sm:$0xff]
    %v199 = vld [vmem:[%s4 + $0x10] sm:$0xff]
    %v200 = vld [vmem:[%s4 + $0x18] sm:$0xff]
    %v201 = vsub.f32 %v193, %v197
    %v202 = vsub.f32 %v194, %v198
    %v203 = vsub.f32 %v195, %v199
    %v204 = vsub.f32 %v196, %v200
    %v205 = vld [vmem:[%s5] sm:$0xff]
    %v206 = vld [vmem:[%s5 + $0x8] sm:$0xff]
    %v207 = vld [vmem:[%s5 + $0x10] sm:$0xff]
    %v208 = vld [vmem:[%s5 + $0x18] sm:$0xff]
    %v209 = vmax.f32 %v205, 1e-06
    %v210 = vmax.f32 %v206, 1e-06
    %v211 = vmax.f32 %v207, 1e-06
    %v212 = vmax.f32 %v208, 1e-06
    %v213 = vlog2.pop %v209
    %v214 = vmul.f32 %v213, 0.6931472
    %v215 = vlog2.pop %v210
    %v216 = vmul.f32 %v215, 0.6931472
    %v217 = vlog2.pop %v211
    %v218 = vmul.f32 %v217, 0.6931472
    %v219 = vlog2.pop %v212
    %v220 = vmul.f32 %v219, 0.6931472
    %v221 = vmul.f32 %v201, %v201
    %v222 = vmul.f32 %v202, %v202
    %v223 = vmul.f32 %v203, %v203
    %v224 = vmul.f32 %v204, %v204
    %v225 = vrcp.pop %v209
    %v226 = vmul.f32 %v221, %v225
    %v227 = vrcp.pop %v210
    %v228 = vmul.f32 %v222, %v227
    %v229 = vrcp.pop %v211
    %v230 = vmul.f32 %v223, %v229
    %v231 = vrcp.pop %v212
    %v232 = vmul.f32 %v224, %v231
    %v233 = vadd.f32 %v214, %v226
    %v234 = vadd.f32 %v216, %v228
    %v235 = vadd.f32 %v218, %v230
    %v236 = vadd.f32 %v220, %v232
    %v237 = vmul.f32 %v233, 0.5
    %v238 = vmul.f32 %v234, 0.5
    %v239 = vmul.f32 %v235, 0.5
    %v240 = vmul.f32 %v236, 0.5
    %242 = vset.pattern.permute.xlu0 0
    %243 = vperm.xlu0 %242, %v31
    %v244 = vpop.permute.xlu0 %243
    %247 = vset.pattern.permute.xlu0 0
    %248 = vperm.xlu0 %247, %v32
    %v249 = vpop.permute.xlu0 %248
    %252 = vset.pattern.permute.xlu0 0
    %253 = vperm.xlu0 %252, %v33
    %v254 = vpop.permute.xlu0 %253
    %257 = vset.pattern.permute.xlu0 0
    %258 = vperm.xlu0 %257, %v34
    %v259 = vpop.permute.xlu0 %258
    %v261 = vmul.f32 %v237, %v244
    %v262 = vmul.f32 %v238, %v249
    %v263 = vmul.f32 %v239, %v254
    %v264 = vmul.f32 %v240, %v259
    %vm265 = vcmask 56320
    %v266 = vsel %vm265, %v261, 0.0
    %v267 = vsel %vm265, %v262, 0.0
    %v268 = vadd.f32 %v266, %v267
    %v269 = vsel %vm265, %v263, 0.0
    %v270 = vadd.f32 %v268, %v269
    %v271 = vsel %vm265, %v264, 0.0
    %v272 = vadd.f32 %v270, %v271
    %v273 = vrot.slane %v272, 4
    %v274 = vadd.f32 %v272, %v273
    %v275 = vrot.slane %v274, 2
    %v276 = vadd.f32 %v274, %v275
    %v277 = vrot.slane %v276, 1
    %v278 = vadd.f32 %v276, %v277
    %v279 = vld [vmem:[%s6] sm:$0x1]
    %v280 = vmul.f32 %v278, %v279
    %282 = vset.pattern.permute.xlu0 0
    %283 = vperm.xlu0 %282, %v51
    %v284 = vpop.permute.xlu0 %283
    %v286 = vmul.f32 %v280, %v284
    %vm287 = vcmask 49152
    %v288 = vsel %vm287, %v286, 0.0
    %289 = vadd.xlane.f32.xlu0 %v288
    %v290 = vpop.xlane.xlu0 %289
    %v291 = vadd.f32 %v192, %v290
    %vm292 = vcmask 0
    %293 = vst.msk [vmem:[#allocation2] sm:$0x1] %vm292, %v291
    %294 = vst.msk [vmem:[#allocation4] sm:$0x1] %vm292, %v192
    %295 = vst.msk [vmem:[%s9] sm:$0x1] %vm287, %v286
    // Predicated region
    $region30: #{_lambda_.1} parent=1 // pred_check
      _
    $region31: #{_lambda_.1} parent=1 // pred_check_branch
      %297 = sbr.rel (0) target = $region33
    $region32: #{_lambda_.1} parent=1 // pred_region
      %s299 = ssub.s32 16, 16
      %300 = vsyncadd [#allocation3], %s299
      %s302 = sshll.u32 [#allocation2], 4
      %s303 = int_to_ptr.vmem [resolvable:$true] %s302
      %305 = dma.vmem_to_hbm [thread:$0]  %s303, 16, %s7, [#allocation3]
    $region33: #{_lambda_.1} parent=1 // pred_fallthru
      _
    // Predicated region
    $region34: #{_lambda_.1} parent=1 // pred_check
      _
    $region35: #{_lambda_.1} parent=1 // pred_check_branch
      %307 = sbr.rel (0) target = $region37
    $region36: #{_lambda_.1} parent=1 // pred_region
      %s309 = ssub.s32 16, 16
      %310 = vsyncadd [#allocation5], %s309
      %s312 = sshll.u32 [#allocation4], 4
      %s313 = int_to_ptr.vmem [resolvable:$true] %s312
      %315 = dma.vmem_to_hbm [thread:$0]  %s313, 16, %s8, [#allocation5]
    $region37: #{_lambda_.1} parent=1 // pred_fallthru
      _
    // Predicated region
    $region38: #{_lambda_.1} parent=1 // pred_check
      _
    $region39: #{_lambda_.1} parent=1 // pred_check_branch
      %317 = sbr.rel (0) target = $region41
    $region40: #{_lambda_.1} parent=1 // pred_region
      _
    $region41: #{_lambda_.1} parent=1 // pred_fallthru
      _
    // Predicated region
    $region42: #{_lambda_.1} parent=1 // pred_check
      _
    $region43: #{_lambda_.1} parent=1 // pred_check_branch
      %319 = sbr.rel (0) target = $region45
    $region44: #{_lambda_.1} parent=1 // pred_region
      %320 = dma.done [#allocation3], 16
    $region45: #{_lambda_.1} parent=1 // pred_fallthru
      _
    // Predicated region
    $region46: #{_lambda_.1} parent=1 // pred_check
      _
    $region47: #{_lambda_.1} parent=1 // pred_check_branch
      %322 = sbr.rel (0) target = $region49
    $region48: #{_lambda_.1} parent=1 // pred_region
      %323 = dma.done [#allocation5], 16
    $region49: #{_lambda_.1} parent=1 // pred_fallthru
      _
    // Predicated region
    $region50: #{_lambda_.1} parent=1 // pred_check
      _
    $region51: #{_lambda_.1} parent=1 // pred_check_branch
      %325 = sbr.rel (0) target = $region53
    $region52: #{_lambda_.1} parent=1 // pred_region
      _
    $region53: #{_lambda_.1} parent=1 // pred_fallthru
      _
    %326 = vsyncpa [#allocation3], 1
    %327 = vsyncpa [#allocation5], 1

</llo_original>
